<compile_context>
chip_gen: v7x
topology: tpu7x:2x2x1
jax: 0.10.0
libtpu: 0.0.40
codegen_flags: <defaults>
</compile_context>

<pallas_src>
import jax
import jax.numpy as jnp
from jax.experimental import pallas as pl
from jax.experimental.pallas import tpu as pltpu

# Lane-dense last dim (multiple of 128) and a tile that is ~2 MiB for f32,
# i.e. 4 buffers (in/out, double-buffered) ~= 8 MiB of VMEM: fits the default
# scoped-VMEM limit on v5e/v6e/v7x while amortizing the ~0.35 us/step overhead.
_LANE = 1024
_MAX_TILE_ROWS = 512


def _identity_copy_kernel(x_ref, o_ref):
    # Elementwise identity on the current VMEM tile (full unmasked stores).
    o_ref[...] = x_ref[...]


def _round_up(v: int, m: int) -> int:
    return pl.cdiv(v, m) * m


def base_vae_forward(x: jax.Array) -> jax.Array:
    """BaseVAE.forward is abstract; the base-class semantics are a no-op.

    x: (N, C, H, W) array (NCHW, matching the PyTorch conv convention).
    Returns an array identical to x, produced through a Pallas TPU kernel.
    """
    # TODO(synk): BaseVAE.forward is @abstractmethod with no body; concrete
    # subclasses (encoder/decoder convs, reparameterization, loss) are not
    # defined in the base class, so only the identity pass-through is kernelized.
    orig_shape = x.shape
    orig_dtype = x.dtype
    total = x.size

    # Lane-dense 2-D slab: last dim is a wide multiple of 128.
    rows = pl.cdiv(total, _LANE)
    if rows >= _MAX_TILE_ROWS:
        tile_rows = _MAX_TILE_ROWS
    else:
        # Small inputs: single tile, rows rounded up to the sublane multiple.
        tile_rows = _round_up(rows, 8)
    rows_padded = _round_up(rows, tile_rows)
    padded_total = rows_padded * _LANE

    flat = x.reshape(-1)
    if padded_total != total:
        # Tail padding so the slab tiles exactly (sliced off after the copy).
        flat = jnp.pad(flat, (0, padded_total - total))
    x2d = flat.reshape(rows_padded, _LANE)

    grid = (rows_padded // tile_rows,)

    out2d = pl.pallas_call(
        _identity_copy_kernel,
        out_shape=jax.ShapeDtypeStruct((rows_padded, _LANE), orig_dtype),
        grid=grid,
        in_specs=[pl.BlockSpec((tile_rows, _LANE), lambda i: (i, 0))],
        out_specs=pl.BlockSpec((tile_rows, _LANE), lambda i: (i, 0)),
        input_output_aliases={0: 0},
        compiler_params=pltpu.CompilerParams(
            dimension_semantics=("parallel",),
        ),
    )(x2d)

    out_flat = out2d.reshape(-1)
    if padded_total != total:
        out_flat = out_flat[:total]
    return out_flat.reshape(orig_shape)


if __name__ == "__main__":
    key = jax.random.PRNGKey(0)
    # Small shapes consistent with a VAE-style NCHW image input.
    x = jax.random.normal(key, (2, 4, 16, 16), dtype=jnp.float32)

    fwd = jax.jit(base_vae_forward)
    y = fwd(x)
    jax.block_until_ready(y)

    # Sanity check: base-class forward semantics == identity.
    assert y.shape == x.shape
    assert y.dtype == x.dtype
    assert jnp.array_equal(y, x)

    print("KERNEL_OK")
</pallas_src>

<mosaic_0001>
module attributes {stable_mosaic.version = 11 : i64} {
  func.func @_identity_copy_kernel(%arg0: i32, %arg1: memref<8x1024xf32, #tpu.memory_space<vmem>>, %arg2: memref<8x1024xf32, #tpu.memory_space<vmem>>) attributes {dimension_semantics = [#tpu.dimension_semantics<parallel>], iteration_bounds = array<i64: 1>, scalar_prefetch = 0 : i64, scratch_operands = 0 : i64, tpu.core_type = #tpu.core_type<tc>, window_params = [{transform_indices = @transform_0, window_bounds = array<i64: 8, 1024>}, {transform_indices = @transform_1, window_bounds = array<i64: 8, 1024>}]} {
    %c0 = arith.constant 0 : index
    %c0_0 = arith.constant 0 : index
    %0 = vector.load %arg1[%c0, %c0_0] : memref<8x1024xf32, #tpu.memory_space<vmem>>, vector<8x1024xf32>
    %c0_1 = arith.constant 0 : index
    %c0_2 = arith.constant 0 : index
    %1 = vector.load %arg2[%c0_1, %c0_2] : memref<8x1024xf32, #tpu.memory_space<vmem>>, vector<8x1024xf32>
    tpu.vector_store %arg2[%c0_1, %c0_2], %0 {strides = array<i32>} : memref<8x1024xf32, #tpu.memory_space<vmem>>, vector<8x1024xf32>,
    return
  }
  func.func @transform_0(%arg0: i32) -> (i32, i32) {
    %c0_i32 = arith.constant 0 : i32
    %c0_i32_0 = arith.constant 0 : i32
    return %arg0, %c0_i32 : i32, i32
  }
  func.func @transform_1(%arg0: i32) -> (i32, i32) {
    %c0_i32 = arith.constant 0 : i32
    %c0_i32_0 = arith.constant 0 : i32
    return %arg0, %c0_i32 : i32, i32
  }
}

</mosaic_0001>

<llo_original>
// kernel: base_vae_forward.1
$region0: #{base_vae_forward.1}
  #allocation0 [shape = 'u32[]', space=smem, size = 0x4, offset = 0x4, fixed_abs, tag = 'smem constant byte address 0x4 - core index']
  #allocation1 [shape = 'u32[144,128]{1,0:T(1,128)}', space=vmem, size = 0x12000, scoped, tag = 'internal scratch']
  %s0 = inlined_call_operand.vmem [shape: f32[8,1024], index: 0, kind: input, shape index: {}, may-alias: {0,1}]
  %s1 = inlined_call_operand.vmem [shape: f32[8,1024], index: 1, kind: output, shape index: {}, may-alias: {0,1}]
  %s2 = sld [smem:[#allocation0]]
  $region14: #{base_vae_forward.1} parent=0
    _
  %s4 = ssub.s32 1, %s2
  %s5 = scalar_select 0, %s4, %s2
  // Predicated region
  $region2: #{base_vae_forward.1} parent=0 // pred_check
    _
  $region3: #{base_vae_forward.1} parent=0 // pred_check_branch
    %7 = sbr.rel (0) target = $region5
  $region4: #{base_vae_forward.1} parent=0 // pred_region
    _
  $region5: #{base_vae_forward.1} parent=0 // pred_fallthru
    _
  %v8 = vld [vmem:[%s0] sm:$0xff]
  %v9 = vld [vmem:[%s0 + $0x8] sm:$0xff]
  %v10 = vld [vmem:[%s0 + $0x10] sm:$0xff]
  %v11 = vld [vmem:[%s0 + $0x18] sm:$0xff]
  %v12 = vld [vmem:[%s0 + $0x20] sm:$0xff]
  %v13 = vld [vmem:[%s0 + $0x28] sm:$0xff]
  %v14 = vld [vmem:[%s0 + $0x30] sm:$0xff]
  %v15 = vld [vmem:[%s0 + $0x38] sm:$0xff]
  %16 = vst [vmem:[%s1] sm:$0xff] %v8
  %17 = vst [vmem:[%s1 + $0x8] sm:$0xff] %v9
  %18 = vst [vmem:[%s1 + $0x10] sm:$0xff] %v10
  %19 = vst [vmem:[%s1 + $0x18] sm:$0xff] %v11
  %20 = vst [vmem:[%s1 + $0x20] sm:$0xff] %v12
  %21 = vst [vmem:[%s1 + $0x28] sm:$0xff] %v13
  %22 = vst [vmem:[%s1 + $0x30] sm:$0xff] %v14
  %23 = vst [vmem:[%s1 + $0x38] sm:$0xff] %v15
  // Predicated region
  $region6: #{base_vae_forward.1} parent=0 // pred_check
    _
  $region7: #{base_vae_forward.1} parent=0 // pred_check_branch
    %25 = sbr.rel (0) target = $region9
  $region8: #{base_vae_forward.1} parent=0 // pred_region
    _
  $region9: #{base_vae_forward.1} parent=0 // pred_fallthru
    _
  // Predicated region
  $region10: #{base_vae_forward.1} parent=0 // pred_check
    _
  $region11: #{base_vae_forward.1} parent=0 // pred_check_branch
    %27 = sbr.rel (0) target = $region13
  $region12: #{base_vae_forward.1} parent=0 // pred_region
    _
  $region13: #{base_vae_forward.1} parent=0 // pred_fallthru
    _

</llo_original>
